<compile_context>
chip_gen: v7x
topology: tpu7x:2x2x1
jax: 0.10.0
libtpu: 0.0.40
codegen_flags: <defaults>
</compile_context>

<pallas_src>
import jax
import jax.numpy as jnp
from jax.experimental import pallas as pl
from jax.experimental.pallas import tpu as pltpu

TRIM_LEN = 8000  # hard-coded in the reference module


def _trim_copy_kernel(x_ref, o_ref):
    # Both refs are identical (1, CT, LT) tiles of the trimmed prefix:
    # a straight tile copy, no in-kernel slicing.
    o_ref[...] = x_ref[...]


def trim(x, trim_len=TRIM_LEN, lt=2048, vmem_budget_per_buf=4 * 1024 * 1024):
    """Pallas equivalent of Trim.forward: x[:, :, :trim_len]."""
    n, c, l = x.shape
    assert l >= trim_len, f"input length {l} < trim length {trim_len}"

    itemsize = jnp.dtype(x.dtype).itemsize

    # Length tile: multiple of 128 (lane width), no larger than the trimmed
    # extent rounded up to the next 128 multiple.
    lt = min(lt, ((trim_len + 127) // 128) * 128)
    lt = max(128, (lt // 128) * 128)

    # Channel tile: full C when it fits the per-buffer VMEM budget, otherwise
    # an 8-multiple chunk (second-to-last dim rule) to bound live VMEM
    # (~2 bufs in + 2 bufs out when double-buffered).
    max_ct = max(8, vmem_budget_per_buf // (lt * itemsize))
    if c <= max_ct:
        ct = c
    else:
        ct = (max_ct // 8) * 8

    grid = (n, pl.cdiv(c, ct), pl.cdiv(trim_len, lt))

    return pl.pallas_call(
        _trim_copy_kernel,
        out_shape=jax.ShapeDtypeStruct((n, c, trim_len), x.dtype),
        grid=grid,
        in_specs=[
            pl.BlockSpec((1, ct, lt), lambda i, j, k: (i, j, k)),
        ],
        out_specs=pl.BlockSpec((1, ct, lt), lambda i, j, k: (i, j, k)),
        compiler_params=pltpu.CompilerParams(
            dimension_semantics=("parallel", "parallel", "parallel"),
        ),
        cost_estimate=pl.CostEstimate(
            flops=0,
            transcendentals=0,
            bytes_accessed=2 * n * c * trim_len * itemsize,
        ),
    )(x)


if __name__ == "__main__":
    # Trim is parameter-free (its __init__ takes *args and stores nothing),
    # so there are no weights to initialize.
    key = jax.random.PRNGKey(0)
    # Input must have length >= 8000 on the last axis for the trim to be
    # meaningful; keep batch/channels small.
    x = jax.random.normal(key, (2, 4, 8192), dtype=jnp.float32)

    out = trim(x)
    out = jax.block_until_ready(out)

    # Reference semantics check: x[:, :, :8000]
    ref = x[:, :, :TRIM_LEN]
    assert out.shape == (2, 4, TRIM_LEN), out.shape
    assert out.dtype == x.dtype
    assert bool(jnp.array_equal(out, ref))

    print("KERNEL_OK")
</pallas_src>

<mosaic_0001>
module attributes {stable_mosaic.version = 11 : i64} {
  func.func @_trim_copy_kernel(%arg0: i32, %arg1: i32, %arg2: i32, %arg3: memref<1x4x2048xf32, #tpu.memory_space<vmem>>, %arg4: memref<1x4x2048xf32, #tpu.memory_space<vmem>>) attributes {dimension_semantics = [#tpu.dimension_semantics<parallel>, #tpu.dimension_semantics<parallel>, #tpu.dimension_semantics<parallel>], iteration_bounds = array<i64: 2, 1, 4>, scalar_prefetch = 0 : i64, scratch_operands = 0 : i64, tpu.core_type = #tpu.core_type<tc>, window_params = [{transform_indices = @transform_0, window_bounds = array<i64: 1, 4, 2048>}, {transform_indices = @transform_1, window_bounds = array<i64: 1, 4, 2048>}]} {
    %c0 = arith.constant 0 : index
    %c0_0 = arith.constant 0 : index
    %c0_1 = arith.constant 0 : index
    %0 = vector.load %arg3[%c0, %c0_0, %c0_1] : memref<1x4x2048xf32, #tpu.memory_space<vmem>>, vector<1x4x2048xf32>
    %c0_2 = arith.constant 0 : index
    %c0_3 = arith.constant 0 : index
    %c0_4 = arith.constant 0 : index
    %1 = vector.load %arg4[%c0_2, %c0_3, %c0_4] : memref<1x4x2048xf32, #tpu.memory_space<vmem>>, vector<1x4x2048xf32>
    tpu.vector_store %arg4[%c0_2, %c0_3, %c0_4], %0 {strides = array<i32>} : memref<1x4x2048xf32, #tpu.memory_space<vmem>>, vector<1x4x2048xf32>,
    return
  }
  func.func @transform_0(%arg0: i32, %arg1: i32, %arg2: i32) -> (i32, i32, i32) {
    %c0_i32 = arith.constant 0 : i32
    return %arg0, %arg1, %arg2 : i32, i32, i32
  }
  func.func @transform_1(%arg0: i32, %arg1: i32, %arg2: i32) -> (i32, i32, i32) {
    %c0_i32 = arith.constant 0 : i32
    return %arg0, %arg1, %arg2 : i32, i32, i32
  }
}

</mosaic_0001>

<llo_original>
// kernel: tpu_custom_call.1
$region0: #{tpu_custom_call.1}
  #allocation0 [shape = 'u32[]', space=smem, size = 0x4, offset = 0x4, fixed_abs, tag = 'smem constant byte address 0x4 - core index']
  #allocation1 [shape = 'u32[144,128]{1,0:T(1,128)}', space=vmem, size = 0x12000, scoped, tag = 'internal scratch']
  %s0 = inlined_call_operand.hbm [shape: f32[2,4,8192], index: 0, kind: input, shape index: {}]
  %s1 = inlined_call_operand.hbm [shape: f32[2,4,8000], index: 1, kind: output, shape index: {}]
  %s2 = sld [smem:[#allocation0]]
  $region41: #{tpu_custom_call.1} parent=0
    _
  %s4 = ssub.s32 1, %s2
  %s5 = scalar_select 0, %s4, %s2
  $region1: #{tpu_custom_call.1} parent=0
    #allocation2 [shape = 'u8[65536]{0}', space=vmem, size = 0x10000, scoped, tag = 'input window, operand 0']
    #allocation3 [shape = 's32[2]{0}', space=sflag, size = 0x8, scoped, tag = 'scoped memory for tpu_custom_call.1']
    #allocation4 [shape = 's32[2]{0}', space=sflag, size = 0x8, scoped, tag = 'scoped memory for tpu_custom_call.1']
    #allocation5 [shape = 'u8[65536]{0}', space=vmem, size = 0x10000, scoped, tag = 'output window, operand 0']
    %6 = vsyncpa [#allocation3], 0
    %s7 = scalar_lea.sflag [#allocation3], 1
    %8 = vsyncpa %s7, 0
    %9 = vsyncpa [#allocation4], 0
    %s10 = scalar_lea.sflag [#allocation4], 1
    %11 = vsyncpa %s10, 0
    loop: start=0, step=1, limit=10
    $region2: #{tpu_custom_call.1} parent=1 // loop_pre_header
      _
    $region3: #{tpu_custom_call.1} parent=1 // loop_header
      %s13 = sphi 0, %s17
      %p14 = scmp.ge.s32.totalorder %s13, 10
      %s20 = sphi 0, %s39
      %s21 = sphi 0, %s35
      %s22 = sphi 0, %s31
      %s23 = sphi 0, %s20
      %s24 = sphi 0, %s21
      %s25 = sphi 0, %s22
      %s26 = sphi 0, %s23
      %s27 = sphi 0, %s24
      %s28 = sphi 0, %s25
      %s46 = sphi 0, %s48
      %s49 = sphi 0, %s46
      %s50 = sphi 0, %s49
      %s66 = sphi 0, %s50
      %s76 = sphi 0, %s78
      %s79 = sphi 0, %s76
      %s80 = sphi 0, %s79
      %s96 = sphi 0, %s80
    $region4: #{tpu_custom_call.1} parent=1 // loop_header_branch
      %16 = sbr.rel (%p14) target = $region8
    $region5: #{tpu_custom_call.1} parent=1 // loop_body
      %s18 = ssub.s32 %s13, 1
      %s19 = ssub.s32 %s13, 2
      %s29 = sadd.s32 1, %s22
      %p30 = scmp.ge.s32.totalorder %s29, 4
      %s31 = scalar_select %p30, 0, %s29
      %s32 = sadd.s32 1, %s21
      %s33 = scalar_select %p30, %s32, %s21
      %p34 = scmp.ge.s32.totalorder %s33, 1
      %s35 = scalar_select %p34, 0, %s33
      %s36 = sadd.s32 1, %s20
      %s37 = scalar_select %p34, %s36, %s20
      %p38 = scmp.ge.s32.totalorder %s37, 2
      %s39 = scalar_select %p38, 0, %s37
      %s40 = ssub.s32 %s20, %s39
      %s41 = ssub.s32 %s21, %s35
      %s42 = sor.u32 %s40, %s41
      %s43 = ssub.s32 %s22, %s31
      %s44 = sor.u32 %s42, %s43
      %p45 = scmp.eq.s32.totalorder %s44, 0
      %s47 = sadd.s32 %s46, 1
      %s48 = scalar_select %p45, %s46, %s47
      %p51 = pneg %p45
      %p52 = scmp.eq.s32.totalorder %s13, 7
      %p53 = por %p51, %p52
      %p54 = scmp.ne.s32.totalorder %s46, %s49
      %p55 = scmp.eq.s32.totalorder %s13, 0
      %p56 = por %p54, %p55
      %p57 = scmp.ne.s32.totalorder %s46, %s49
      %p58 = scmp.eq.s32.totalorder %s18, 7
      %p59 = por %p57, %p58
      %p60 = scmp.ne.s32.totalorder %s49, %s50
      %p61 = scmp.eq.s32.totalorder %s18, 0
      %p62 = por %p60, %p61
      %p63 = scmp.ne.s32.totalorder %s49, %s50
      %p64 = scmp.eq.s32.totalorder %s19, 7
      %p65 = por %p63, %p64
      %p67 = scmp.ne.s32.totalorder %s50, %s66
      %p68 = scmp.eq.s32.totalorder %s19, 0
      %p69 = por %p67, %p68
      %s70 = ssub.s32 %s20, %s39
      %s71 = ssub.s32 %s21, %s35
      %s72 = sor.u32 %s70, %s71
      %s73 = ssub.s32 %s22, %s31
      %s74 = sor.u32 %s72, %s73
      %p75 = scmp.eq.s32.totalorder %s74, 0
      %s77 = sadd.s32 %s76, 1
      %s78 = scalar_select %p75, %s76, %s77
      %p81 = pneg %p75
      %p82 = scmp.eq.s32.totalorder %s13, 7
      %p83 = por %p81, %p82
      %p84 = scmp.ne.s32.totalorder %s76, %s79
      %p85 = scmp.eq.s32.totalorder %s13, 0
      %p86 = por %p84, %p85
      %p87 = scmp.ne.s32.totalorder %s76, %s79
      %p88 = scmp.eq.s32.totalorder %s18, 7
      %p89 = por %p87, %p88
      %p90 = scmp.ne.s32.totalorder %s79, %s80
      %p91 = scmp.eq.s32.totalorder %s18, 0
      %p92 = por %p90, %p91
      %p93 = scmp.ne.s32.totalorder %s79, %s80
      %p94 = scmp.eq.s32.totalorder %s19, 7
      %p95 = por %p93, %p94
      %p97 = scmp.ne.s32.totalorder %s80, %s96
      %p98 = scmp.eq.s32.totalorder %s19, 0
      %p99 = por %p97, %p98
      %p100 = scmp.le.s32.totalorder 1, %s13
      %p101 = scmp.lt.s32.totalorder %s13, 9
      %p102 = pnand %p100, %p101
      %p103 = pneg %p102
      // Predicated region
      $region9: #{tpu_custom_call.1} parent=5 // pred_check
        _
      $region10: #{tpu_custom_call.1} parent=5 // pred_check_branch
        %105 = sbr.rel (%p102) target = $region12
      $region11: #{tpu_custom_call.1} parent=5 // pred_region
        %s106 = ssub.s32 %s13, 1
      $region12: #{tpu_custom_call.1} parent=5 // pred_fallthru
        _
      %p107 = scmp.lt.s32.totalorder %s13, 8
      // Predicated region
      $region13: #{tpu_custom_call.1} parent=5 // pred_check
        %p108 = pneg %p107
      $region14: #{tpu_custom_call.1} parent=5 // pred_check_branch
        %110 = sbr.rel (%p108) target = $region16
      $region15: #{tpu_custom_call.1} parent=5 // pred_region
        // Predicated region
        $region17: #{tpu_custom_call.1} parent=15 // pred_check
          %p111 = pneg %p56
        $region18: #{tpu_custom_call.1} parent=15 // pred_check_branch
          %113 = sbr.rel (%p111) target = $region20
        $region19: #{tpu_custom_call.1} parent=15 // pred_region
          %s114 = sand.u32 %s46, 1
          %s115 = scalar_lea.sflag [#allocation3], %s114
          %s116 = sand.u32 %s46, 1
          %s117 = smul.addr %s116, 64
          %s118 = scalar_lea.vmem [#allocation2], %s117
          %s119 = smul.u32 16, %s22
          %s121 = ssub.s32 1024, 1024
          %122 = vsyncadd %s115, %s121
          %s123 = smul.addr %s21, 64
          %s124 = sadd.s32 %s119, %s123
          %s125 = smul.addr %s20, 64
          %s126 = sadd.s32 %s124, %s125
          %s127 = smul.addr %s126, 64
          %s128 = scalar_lea.hbm %s0, %s127
          %s130 = sshll.u32 %s118, 4
          %s131 = int_to_ptr.vmem [resolvable:$true] %s130
          %133 = dma.hbm_to_vmem [thread:$0]  %s128, 1024, %s131, %s115
        $region20: #{tpu_custom_call.1} parent=15 // pred_fallthru
          _
      $region16: #{tpu_custom_call.1} parent=5 // pred_fallthru
        _
      %p134 = scmp.le.s32.totalorder 1, %s13
      %p135 = scmp.lt.s32.totalorder %s13, 9
      %p136 = pnand %p134, %p135
      %p137 = pneg %p136
      // Predicated region
      $region21: #{tpu_custom_call.1} parent=5 // pred_check
        _
      $region22: #{tpu_custom_call.1} parent=5 // pred_check_branch
        %139 = sbr.rel (%p136) target = $region24
      $region23: #{tpu_custom_call.1} parent=5 // pred_region
        %s140 = ssub.s32 %s13, 1
        %s141 = sand.u32 %s49, 1
        %s142 = scalar_lea.sflag [#allocation3], %s141
        %s143 = sand.u32 %s49, 1
        %s144 = smul.addr %s143, 64
        %s145 = scalar_lea.vmem [#allocation2], %s144
        // Predicated region
        $region25: #{tpu_custom_call.1} parent=23 // pred_check
          %p146 = pneg %p62
        $region26: #{tpu_custom_call.1} parent=23 // pred_check_branch
          %148 = sbr.rel (%p146) target = $region28
        $region27: #{tpu_custom_call.1} parent=23 // pred_region
          %149 = dma.done %s142, 1024
        $region28: #{tpu_custom_call.1} parent=23 // pred_fallthru
          _
        %s150 = sand.u32 %s49, 1
        %s151 = scalar_lea.sflag [#allocation3], %s150
        %s152 = sand.u32 %s49, 1
        %s153 = smul.addr %s152, 64
        %s154 = scalar_lea.vmem [#allocation2], %s153
        %p155 = pneg %p62
        %p156 = pneg %p59
        %p157 = pneg %p92
        %p158 = pneg %p89
        %s159 = sand.u32 %s79, 1
        %s160 = scalar_lea.sflag [#allocation4], %s159
        %s161 = sand.u32 %s79, 1
        %s162 = smul.addr %s161, 64
        %s163 = scalar_lea.vmem [#allocation5], %s162
        %s164 = smul.u32 16, %s25
        %s165 = smul.u32 16, %s25
        %s166 = ssub.s32 63, %s165
        %p167 = scmp.lt.s32.totalorder %s166, 16
        %s168 = scalar_select %p167, %s166, 16
        %s169 = smul.u32 64, %s168
        %v170 = vld [vmem:[%s145] sm:$0xff]
        %v171 = vld [vmem:[%s145 + $0x8] sm:$0xff]
        %v172 = vld [vmem:[%s145 + $0x10] sm:$0xff]
        %v173 = vld [vmem:[%s145 + $0x18] sm:$0xff]
        %v174 = vld [vmem:[%s145 + $0x20] sm:$0xff]
        %v175 = vld [vmem:[%s145 + $0x28] sm:$0xff]
        %v176 = vld [vmem:[%s145 + $0x30] sm:$0xff]
        %v177 = vld [vmem:[%s145 + $0x38] sm:$0xff]
        %178 = vst [vmem:[%s163] sm:$0xff] %v170
        %179 = vst [vmem:[%s163 + $0x8] sm:$0xff] %v171
        %180 = vst [vmem:[%s163 + $0x10] sm:$0xff] %v172
        %181 = vst [vmem:[%s163 + $0x18] sm:$0xff] %v173
        %182 = vst [vmem:[%s163 + $0x20] sm:$0xff] %v174
        %183 = vst [vmem:[%s163 + $0x28] sm:$0xff] %v175
        %184 = vst [vmem:[%s163 + $0x30] sm:$0xff] %v176
        %185 = vst [vmem:[%s163 + $0x38] sm:$0xff] %v177
        %s186 = sand.u32 %s79, 1
        %s187 = scalar_lea.sflag [#allocation4], %s186
        %s188 = sand.u32 %s79, 1
        %s189 = smul.addr %s188, 64
        %s190 = scalar_lea.vmem [#allocation5], %s189
        // Predicated region
        $region29: #{tpu_custom_call.1} parent=23 // pred_check
          %p191 = pneg %p89
        $region30: #{tpu_custom_call.1} parent=23 // pred_check_branch
          %193 = sbr.rel (%p191) target = $region32
        $region31: #{tpu_custom_call.1} parent=23 // pred_region
          %s194 = smul.u32 16, %s25
          %s195 = ssub.s32 63, %s194
          %p196 = scmp.lt.s32.totalorder %s195, 16
          %s197 = scalar_select %p196, %s195, 16
          %s198 = smul.u32 64, %s197
          %s200 = ssub.s32 1024, %s198
          %201 = vsyncadd %s187, %s200
          %p202 = scmp.ne.s32.totalorder 0, %s198
          %s203 = smul.addr %s24, 63
          %s204 = sadd.s32 %s194, %s203
          %s205 = smul.addr %s23, 63
          %s206 = sadd.s32 %s204, %s205
          %s207 = smul.addr %s206, 64
          %s208 = scalar_lea.hbm %s1, %s207
          %s209 = smul.u32 %s197, 4
          %s210 = sshll.u32 %s209, 4
          %s211 = sshll.u32 %s190, 4
          %s212 = int_to_ptr.vmem [resolvable:$true] %s211
          %214 = dma.vmem_to_hbm [thread:$0]  (%p202), %s212, %s210, %s208, %s187
        $region32: #{tpu_custom_call.1} parent=23 // pred_fallthru
          _
      $region24: #{tpu_custom_call.1} parent=5 // pred_fallthru
        _
      %p215 = scmp.le.s32.totalorder 2, %s13
      // Predicated region
      $region33: #{tpu_custom_call.1} parent=5 // pred_check
        %p216 = pneg %p215
      $region34: #{tpu_custom_call.1} parent=5 // pred_check_branch
        %218 = sbr.rel (%p216) target = $region36
      $region35: #{tpu_custom_call.1} parent=5 // pred_region
        %s219 = ssub.s32 %s13, 2
        // Predicated region
        $region37: #{tpu_custom_call.1} parent=35 // pred_check
          %p220 = pneg %p95
        $region38: #{tpu_custom_call.1} parent=35 // pred_check_branch
          %222 = sbr.rel (%p220) target = $region40
        $region39: #{tpu_custom_call.1} parent=35 // pred_region
          %s223 = sand.u32 %s80, 1
          %s224 = scalar_lea.sflag [#allocation4], %s223
          %s225 = sand.u32 %s80, 1
          %s226 = smul.addr %s225, 64
          %s227 = scalar_lea.vmem [#allocation5], %s226
          %228 = dma.done %s224, 1024
        $region40: #{tpu_custom_call.1} parent=35 // pred_fallthru
          _
      $region36: #{tpu_custom_call.1} parent=5 // pred_fallthru
        _
    $region6: #{tpu_custom_call.1} parent=1 // loop_footer
      %s17 = sadd.s32 1, %s13
    $region7: #{tpu_custom_call.1} parent=1 // loop_footer_branch
      %12 = sbr.rel target = $region3
    $region8: #{tpu_custom_call.1} parent=1 // loop_exit
      _
    %229 = vsyncpa [#allocation3], 1
    %s230 = scalar_lea.sflag [#allocation3], 1
    %231 = vsyncpa %s230, 1
    %232 = vsyncpa [#allocation4], 1
    %s233 = scalar_lea.sflag [#allocation4], 1
    %234 = vsyncpa %s233, 1

</llo_original>
